<compile_context>
chip_gen: v7x
topology: tpu7x:2x2x1
jax: 0.10.0
libtpu: 0.0.40
codegen_flags: <defaults>
</compile_context>

<pallas_src>
import functools

import jax
import jax.numpy as jnp
import numpy as np
from jax.experimental import pallas as pl
from jax.experimental.pallas import tpu as pltpu

_MIB = 1024 * 1024


def _vmem_capacity_bytes():
    """Device VMEM capacity; conservative 64 MiB (v7x floor) if the query fails."""
    try:
        return int(pltpu.get_tpu_info().vmem_capacity_bytes)
    except Exception:
        return 64 * _MIB


def _pick_row_tile(n, vmem_cap, a_resident):
    """Largest convenient row tile dividing N; cap at 256 on small-VMEM parts when A streams."""
    if n <= 512:
        return n
    if a_resident or vmem_cap >= 96 * _MIB:
        prefs = (512, 256, 128, 64, 32, 16)
    else:
        prefs = (256, 128, 64, 32, 16)
    for t in prefs:
        if n % t == 0:
            return t
    return n  # fall back to a single (full) row block


def grouprevres_kernel(x_ref, a_ref, w_ref, b_ref, h0_ref, out_ref, h_scr,
                       *, row_tile, a_resident):
    """Grid = (groups, row_tiles). Group axis carries h = y_in @ W sequentially via h_scr."""
    i = pl.program_id(0)            # group index (sequential carry)
    r = pl.program_id(1)            # row-tile index within the group
    num_groups = pl.num_programs(0)

    slot = i % 2                    # h double-buffer slot read by this group
    row_off = pl.multiple_of(r * row_tile, row_tile)

    # Seed group 0's projection h0 = (sum(xs[1:]) @ W0), precomputed in the wrapper.
    @pl.when(jnp.logical_and(i == 0, r == 0))
    def _():
        h_scr[0] = h0_ref[...]

    # Row tile of the aggregation: A[rows] @ h_i   (hot MXU matmul, bf16 x bf16 -> f32 acc).
    if a_resident:
        a_rows = a_ref[pl.ds(row_off, row_tile), :]
    else:
        a_rows = a_ref[...]
    agg = jnp.dot(a_rows, h_scr[slot], preferred_element_type=jnp.float32)

    # Residual + bias (VPU elementwise); lane-dense full-block output store.
    y_new = x_ref[...] + agg + b_ref[...]
    out_ref[...] = y_new.astype(out_ref.dtype)

    # Fused next-group projection: h_{i+1}[rows] = y_new @ W_{i+1}  (bf16 store, done once).
    # This overlaps the old per-group serial (N,d)x(d,d) matmul with the streamed A@h work,
    # removing the group-boundary pipeline bubble. Skipped for the last group.
    @pl.when(i + 1 < num_groups)
    def _():
        w_next = w_ref[jnp.minimum(i + 1, num_groups - 1)]
        h_next = jnp.dot(y_new.astype(jnp.bfloat16), w_next,
                         preferred_element_type=jnp.float32)
        h_scr[1 - slot, pl.ds(row_off, row_tile), :] = h_next.astype(jnp.bfloat16)


def group_rev_res_forward(x, a_norm, W, b, groups, *, row_tile=None):
    N, D = x.shape
    assert D % groups == 0
    d = D // groups
    # Channel slabs are blocked along the lane dim; keep them 128-aligned (or a single group).
    assert d % 128 == 0 or groups == 1, "feature group width should be a multiple of 128"

    vmem_cap = _vmem_capacity_bytes()
    usable = int(vmem_cap * 0.85)

    # bf16 MXU operands at the call boundary (halves A/W HBM + VMEM traffic); f32 accumulation.
    # NOTE: if this is called in a loop, hoist these casts out of the loop (they re-read N^2 HBM).
    a_bf16 = a_norm if a_norm.dtype == jnp.bfloat16 else a_norm.astype(jnp.bfloat16)
    w_bf16 = W if W.dtype == jnp.bfloat16 else W.astype(jnp.bfloat16)
    b3 = b.reshape(groups, 1, d).astype(jnp.float32)

    # Group-0 projection h0 = (sum(xs[1:]) @ W0): one small XLA matmul outside the kernel, so the
    # kernel needs neither a resident f32 y_init input nor a group-0 full-N matmul bubble.
    if groups > 1:
        y_init = jnp.sum(x.reshape(N, groups, d)[:, 1:, :], axis=1, dtype=jnp.float32)
    else:
        y_init = jnp.zeros((N, d), jnp.float32)
    h0 = jnp.dot(y_init.astype(jnp.bfloat16), w_bf16[0],
                 preferred_element_type=jnp.float32).astype(jnp.bfloat16)

    # --- device-aware VMEM budgeting (pipelined inputs counted double-buffered; scratch exact) ---
    itemsize = int(x.dtype.itemsize)
    fixed = (2 * groups * d * d * 2    # W (all groups, resident bf16)
             + 2 * 1 * d * 4           # b_i tile
             + 2 * N * d * 2           # h0 (resident bf16)
             + 2 * N * d * 2)          # h_scr scratch (2, N, d) bf16
    slab_allow = 4 * min(N, 512) * d * itemsize   # x + out slabs, double buffered
    a_resident = (fixed + slab_allow + 2 * N * N * 2) <= usable

    if row_tile is None:
        row_tile = _pick_row_tile(N, vmem_cap, a_resident)
    assert N % row_tile == 0
    num_row_tiles = N // row_tile

    a_bytes = (2 * N * N * 2) if a_resident else (2 * row_tile * N * 2)
    total = fixed + 4 * row_tile * d * itemsize + a_bytes
    vmem_limit = int(min(max(total * 1.3 + _MIB, 32 * _MIB), vmem_cap - 2 * _MIB))

    if a_resident:
        # Loaded once (constant block index), reused by every group -> A HBM traffic / groups.
        a_spec = pl.BlockSpec((N, N), lambda i, r: (0, 0))
    else:
        # TODO(synk): on 128 MiB parts, pipeline_mode=pl.Buffered(3) here hides the group-boundary
        #             block-index reset when A cannot be made resident.
        a_spec = pl.BlockSpec((row_tile, N), lambda i, r: (r, 0))

    kernel = functools.partial(grouprevres_kernel, row_tile=row_tile, a_resident=a_resident)

    return pl.pallas_call(
        kernel,
        out_shape=jax.ShapeDtypeStruct((N, D), x.dtype),
        grid_spec=pltpu.PrefetchScalarGridSpec(
            num_scalar_prefetch=0,
            grid=(groups, num_row_tiles),
            in_specs=[
                pl.BlockSpec((row_tile, d), lambda i, r: (r, i)),             # x: row x group slab
                a_spec,                                                       # A_norm
                pl.BlockSpec((groups, d, d), lambda i, r: (0, 0, 0)),         # all W, resident
                pl.BlockSpec((pl.Squeezed(), 1, d), lambda i, r: (i, 0, 0)),  # b_i -> (1, d)
                pl.BlockSpec((N, d), lambda i, r: (0, 0)),                    # h0, resident
            ],
            out_specs=pl.BlockSpec((row_tile, d), lambda i, r: (r, i)),       # per-slab writeback
            scratch_shapes=[
                pltpu.VMEM((2, N, d), jnp.bfloat16),   # double-buffered h carry (bf16)
            ],
        ),
        compiler_params=pltpu.CompilerParams(
            dimension_semantics=("arbitrary", "arbitrary"),  # sequential group carry
            vmem_limit_bytes=vmem_limit,
        ),
    )(x, a_bf16, w_bf16, b3, h0)


def group_rev_res_ref(x, a_norm, W, b, groups):
    """Pure-JAX f32 reference mirroring GroupRevRes._forward."""
    N, D = x.shape
    d = D // groups
    xs = [x[:, i * d:(i + 1) * d] for i in range(groups)]
    y_in = jnp.zeros((N, d), jnp.float32)
    for g in range(1, groups):
        y_in = y_in + xs[g]
    ys = []
    for i in range(groups):
        f = a_norm @ (y_in @ W[i]) + b[i]
        y_in = xs[i] + f
        ys.append(y_in)
    return jnp.concatenate(ys, axis=-1)


if __name__ == "__main__":
    # Small, deterministic problem: N=8 nodes, D=256 features, groups=2 (d=128).
    N, D, groups = 8, 256, 2
    d = D // groups

    key = jax.random.PRNGKey(0)
    k_x, k_e, k_w, k_b = jax.random.split(key, 4)

    x = jax.random.normal(k_x, (N, D), dtype=jnp.float32)

    # Deterministic random graph -> dense symmetric-normalized adjacency with self-loops.
    edge_logits = jax.random.uniform(k_e, (N, N))
    adj = (edge_logits > 0.6).astype(jnp.float32)
    adj = adj + jnp.eye(N, dtype=jnp.float32)
    adj = jnp.clip(adj + adj.T, 0.0, 1.0)
    deg = jnp.sum(adj, axis=1)
    dinv = 1.0 / jnp.sqrt(deg)
    a_norm = adj * dinv[:, None] * dinv[None, :]

    # Per-group GraphConv parameters (deterministic init).
    W = jax.random.normal(k_w, (groups, d, d), dtype=jnp.float32) * (1.0 / jnp.sqrt(d))
    b = jax.random.normal(k_b, (groups, d), dtype=jnp.float32) * 0.1

    out = group_rev_res_forward(x, a_norm, W, b, groups)
    out = jax.block_until_ready(out)

    ref = group_rev_res_ref(x, a_norm, W, b, groups)
    # Relaxed tolerance: kernel feeds bf16 operands to the MXU (f32 accumulation).
    np.testing.assert_allclose(np.asarray(out), np.asarray(ref), rtol=5e-2, atol=5e-2)

    print("KERNEL_OK")
</pallas_src>

<mosaic_0001>
module attributes {stable_mosaic.version = 11 : i64} {
  func.func @grouprevres_kernel(%arg0: i32, %arg1: i32, %arg2: memref<8x128xf32, #tpu.memory_space<vmem>>, %arg3: memref<8x8xbf16, #tpu.memory_space<vmem>>, %arg4: memref<2x128x128xbf16, #tpu.memory_space<vmem>>, %arg5: memref<1x1x128xf32, #tpu.memory_space<vmem>>, %arg6: memref<8x128xbf16, #tpu.memory_space<vmem>>, %arg7: memref<8x128xf32, #tpu.memory_space<vmem>>, %arg8: memref<2x8x128xbf16, #tpu.memory_space<vmem>>) attributes {dimension_semantics = [#tpu.dimension_semantics<arbitrary>, #tpu.dimension_semantics<arbitrary>], iteration_bounds = array<i64: 2, 1>, scalar_prefetch = 0 : i64, scratch_operands = 1 : i64, tpu.core_type = #tpu.core_type<tc>, window_params = [{transform_indices = @transform_0, window_bounds = array<i64: 8, 128>}, {pipeline_mode = #tpu.pipeline_mode<synchronous>, transform_indices = @transform_1, window_bounds = array<i64: 8, 8>}, {pipeline_mode = #tpu.pipeline_mode<synchronous>, transform_indices = @transform_2, window_bounds = array<i64: 2, 128, 128>}, {transform_indices = @transform_3, window_bounds = array<i64: 1, 1, 128>}, {pipeline_mode = #tpu.pipeline_mode<synchronous>, transform_indices = @transform_4, window_bounds = array<i64: 8, 128>}, {transform_indices = @transform_5, window_bounds = array<i64: 8, 128>}]} {
    %c2_i32 = arith.constant 2 : i32
    %c0_i32 = arith.constant 0 : i32
    %0 = arith.cmpi eq, %c2_i32, %c0_i32 : i32
    %c1_i32 = arith.constant 1 : i32
    %1 = arith.select %0, %c1_i32, %c2_i32 : i32
    %2 = arith.remsi %arg0, %1 : i32
    %c0_i32_0 = arith.constant 0 : i32
    %3 = arith.cmpi ne, %2, %c0_i32_0 : i32
    %c0_i32_1 = arith.constant 0 : i32
    %4 = arith.cmpi slt, %2, %c0_i32_1 : i32
    %c0_i32_2 = arith.constant 0 : i32
    %5 = arith.cmpi slt, %1, %c0_i32_2 : i32
    %6 = arith.xori %4, %5 : i1
    %7 = arith.andi %6, %3 : i1
    %8 = arith.addi %2, %1 : i32
    %9 = arith.select %7, %8, %2 : i32
    %c8_i32 = arith.constant 8 : i32
    %10 = arith.muli %arg1, %c8_i32 : i32
    %11 = tpu.assume_multiple %10, 8 : i32
    %c0_i32_3 = arith.constant 0 : i32
    %12 = arith.cmpi eq, %arg0, %c0_i32_3 : i32
    %c0_i32_4 = arith.constant 0 : i32
    %13 = arith.cmpi eq, %arg1, %c0_i32_4 : i32
    %14 = arith.andi %12, %13 : i1
    %15 = arith.extui %14 : i1 to i32
    %c0_i32_5 = arith.constant 0 : i32
    %16 = arith.cmpi ne, %15, %c0_i32_5 : i32
    scf.if %16 {
      %c0_18 = arith.constant 0 : index
      %c0_19 = arith.constant 0 : index
      %34 = vector.load %arg6[%c0_18, %c0_19] : memref<8x128xbf16, #tpu.memory_space<vmem>>, vector<8x128xbf16>
      %c0_20 = arith.constant 0 : index
      %c0_21 = arith.constant 0 : index
      %c0_22 = arith.constant 0 : index
      %35 = vector.load %arg8[%c0_20, %c0_21, %c0_22] : memref<2x8x128xbf16, #tpu.memory_space<vmem>>, vector<1x8x128xbf16>
      %36 = vector.shape_cast %35 : vector<1x8x128xbf16> to vector<8x128xbf16>
      %37 = vector.shape_cast %34 : vector<8x128xbf16> to vector<1x8x128xbf16>
      tpu.vector_store %arg8[%c0_20, %c0_21, %c0_22], %37 {strides = array<i32>} : memref<2x8x128xbf16, #tpu.memory_space<vmem>>, vector<1x8x128xbf16>,
    } else {
    }
    %17 = arith.index_cast %11 : i32 to index
    %c0 = arith.constant 0 : index
    %18 = vector.load %arg3[%17, %c0] : memref<8x8xbf16, #tpu.memory_space<vmem>>, vector<8x8xbf16>
    %19 = arith.index_cast %9 : i32 to index
    %c0_6 = arith.constant 0 : index
    %c0_7 = arith.constant 0 : index
    %20 = vector.load %arg8[%19, %c0_6, %c0_7] : memref<2x8x128xbf16, #tpu.memory_space<vmem>>, vector<1x8x128xbf16>
    %21 = vector.shape_cast %20 : vector<1x8x128xbf16> to vector<8x128xbf16>
    %cst = arith.constant dense<0.000000e+00> : vector<8x128xf32>
    %22 = tpu.matmul %18, %21, %cst {dimension_numbers = #tpu.dot_dimension_numbers<[1], [0], [0], [1], [0, 0, 1, 1], [], []>} : vector<8x8xbf16>, vector<8x128xbf16>, vector<8x128xf32> -> vector<8x128xf32>
    %c0_8 = arith.constant 0 : index
    %c0_9 = arith.constant 0 : index
    %23 = vector.load %arg2[%c0_8, %c0_9] : memref<8x128xf32, #tpu.memory_space<vmem>>, vector<8x128xf32>
    %24 = arith.addf %23, %22 : vector<8x128xf32>
    %c0_10 = arith.constant 0 : index
    %c0_11 = arith.constant 0 : index
    %c0_12 = arith.constant 0 : index
    %25 = vector.load %arg5[%c0_10, %c0_11, %c0_12] : memref<1x1x128xf32, #tpu.memory_space<vmem>>, vector<1x1x128xf32>
    %26 = vector.shape_cast %25 : vector<1x1x128xf32> to vector<1x128xf32>
    %27 = vector.broadcast %26 : vector<1x128xf32> to vector<8x128xf32>
    %28 = arith.addf %24, %27 : vector<8x128xf32>
    %c0_13 = arith.constant 0 : index
    %c0_14 = arith.constant 0 : index
    %29 = vector.load %arg7[%c0_13, %c0_14] : memref<8x128xf32, #tpu.memory_space<vmem>>, vector<8x128xf32>
    tpu.vector_store %arg7[%c0_13, %c0_14], %28 {strides = array<i32>} : memref<8x128xf32, #tpu.memory_space<vmem>>, vector<8x128xf32>,
    %c1_i32_15 = arith.constant 1 : i32
    %30 = arith.addi %arg0, %c1_i32_15 : i32
    %c2_i32_16 = arith.constant 2 : i32
    %31 = arith.cmpi slt, %30, %c2_i32_16 : i32
    %32 = arith.extui %31 : i1 to i32
    %c0_i32_17 = arith.constant 0 : i32
    %33 = arith.cmpi ne, %32, %c0_i32_17 : i32
    scf.if %33 {
      %c1_i32_18 = arith.constant 1 : i32
      %34 = arith.addi %arg0, %c1_i32_18 : i32
      %c1_i32_19 = arith.constant 1 : i32
      %35 = arith.minsi %34, %c1_i32_19 : i32
      %36 = arith.index_cast %35 : i32 to index
      %c0_20 = arith.constant 0 : index
      %c0_21 = arith.constant 0 : index
      %37 = vector.load %arg4[%36, %c0_20, %c0_21] : memref<2x128x128xbf16, #tpu.memory_space<vmem>>, vector<1x128x128xbf16>
      %38 = vector.shape_cast %37 : vector<1x128x128xbf16> to vector<128x128xbf16>
      %39 = arith.truncf %28 : vector<8x128xf32> to vector<8x128xbf16>
      %cst_22 = arith.constant dense<0.000000e+00> : vector<8x128xf32>
      %40 = tpu.matmul %39, %38, %cst_22 {dimension_numbers = #tpu.dot_dimension_numbers<[1], [0], [0], [1], [0, 0, 1, 1], [], []>} : vector<8x128xbf16>, vector<128x128xbf16>, vector<8x128xf32> -> vector<8x128xf32>
      %41 = arith.truncf %40 : vector<8x128xf32> to vector<8x128xbf16>
      %c1_i32_23 = arith.constant 1 : i32
      %42 = arith.subi %c1_i32_23, %9 : i32
      %43 = arith.index_cast %42 : i32 to index
      %44 = arith.index_cast %11 : i32 to index
      %c0_24 = arith.constant 0 : index
      %45 = vector.load %arg8[%43, %44, %c0_24] : memref<2x8x128xbf16, #tpu.memory_space<vmem>>, vector<1x8x128xbf16>
      %46 = vector.shape_cast %45 : vector<1x8x128xbf16> to vector<8x128xbf16>
      %47 = vector.shape_cast %41 : vector<8x128xbf16> to vector<1x8x128xbf16>
      tpu.vector_store %arg8[%43, %44, %c0_24], %47 {strides = array<i32>} : memref<2x8x128xbf16, #tpu.memory_space<vmem>>, vector<1x8x128xbf16>,
    } else {
    }
    return
  }
  func.func @transform_0(%arg0: i32, %arg1: i32) -> (i32, i32) {
    %c0_i32 = arith.constant 0 : i32
    return %arg1, %arg0 : i32, i32
  }
  func.func @transform_1(%arg0: i32, %arg1: i32) -> (i32, i32) {
    %c0_i32 = arith.constant 0 : i32
    %c0_i32_0 = arith.constant 0 : i32
    %c0_i32_1 = arith.constant 0 : i32
    return %c0_i32, %c0_i32_0 : i32, i32
  }
  func.func @transform_2(%arg0: i32, %arg1: i32) -> (i32, i32, i32) {
    %c0_i32 = arith.constant 0 : i32
    %c0_i32_0 = arith.constant 0 : i32
    %c0_i32_1 = arith.constant 0 : i32
    %c0_i32_2 = arith.constant 0 : i32
    return %c0_i32, %c0_i32_0, %c0_i32_1 : i32, i32, i32
  }
  func.func @transform_3(%arg0: i32, %arg1: i32) -> (i32, i32, i32) {
    %c0_i32 = arith.constant 0 : i32
    %c0_i32_0 = arith.constant 0 : i32
    %c0_i32_1 = arith.constant 0 : i32
    return %arg0, %c0_i32, %c0_i32_0 : i32, i32, i32
  }
  func.func @transform_4(%arg0: i32, %arg1: i32) -> (i32, i32) {
    %c0_i32 = arith.constant 0 : i32
    %c0_i32_0 = arith.constant 0 : i32
    %c0_i32_1 = arith.constant 0 : i32
    return %c0_i32, %c0_i32_0 : i32, i32
  }
  func.func @transform_5(%arg0: i32, %arg1: i32) -> (i32, i32) {
    %c0_i32 = arith.constant 0 : i32
    return %arg1, %arg0 : i32, i32
  }
}

</mosaic_0001>

<llo_original>
// kernel: tpu_custom_call.1
$region0: #{tpu_custom_call.1}
  #allocation0 [shape = 'u32[]', space=smem, size = 0x4, offset = 0x4, fixed_abs, tag = 'smem constant byte address 0x4 - core index']
  #allocation1 [shape = 'u32[144,128]{1,0:T(1,128)}', space=vmem, size = 0x12000, scoped, tag = 'internal scratch']
  #allocation2 [shape = 'bf16[2,8,128]{2,1,0:T(8,128)(2,1)}', space=vmem, size = 0x1000, scoped, tag = 'scratch operand']
  %s0 = inlined_call_operand.hbm [shape: f32[8,256], index: 0, kind: input, shape index: {}]
  %s1 = inlined_call_operand.hbm [shape: bf16[8,8], index: 1, kind: input, shape index: {}]
  %s2 = inlined_call_operand.hbm [shape: bf16[2,128,128], index: 2, kind: input, shape index: {}]
  %s3 = inlined_call_operand.vmem [shape: f32[2,1,128], index: 3, kind: input, shape index: {}]
  %s4 = inlined_call_operand.vmem [shape: bf16[8,128], index: 4, kind: input, shape index: {}]
  %s5 = inlined_call_operand.hbm [shape: f32[8,256], index: 5, kind: output, shape index: {}]
  %s6 = sld [smem:[#allocation0]]
  $region73: #{tpu_custom_call.1} parent=0
    _
  %s8 = ssub.s32 1, %s6
  %s9 = scalar_select 0, %s8, %s6
  $region1: #{tpu_custom_call.1} parent=0
    #allocation3 [shape = 'u8[8192]{0}', space=vmem, size = 0x2000, scoped, tag = 'input window, operand 0']
    #allocation4 [shape = 's32[2]{0}', space=sflag, size = 0x8, scoped, tag = 'scoped memory for tpu_custom_call.1']
    #allocation5 [shape = 's32[2]{0}', space=sflag, size = 0x8, scoped, tag = 'scoped memory for tpu_custom_call.1']
    #allocation6 [shape = 'u8[2048]{0}', space=vmem, size = 0x800, scoped, tag = 'input window, operand 1, single buffered']
    #allocation7 [shape = 's32[1]{0}', space=sflag, size = 0x4, scoped, tag = 'scoped memory for tpu_custom_call.1']
    #allocation8 [shape = 'u8[65536]{0}', space=vmem, size = 0x10000, scoped, tag = 'input window, operand 2, single buffered']
    #allocation9 [shape = 'u8[8192]{0}', space=vmem, size = 0x2000, scoped, tag = 'output window, operand 0']
    %10 = vsyncpa [#allocation4], 0
    %s11 = scalar_lea.sflag [#allocation4], 1
    %12 = vsyncpa %s11, 0
    %13 = vsyncpa [#allocation7], 0
    %14 = vsyncpa [#allocation5], 0
    %s15 = scalar_lea.sflag [#allocation5], 1
    %16 = vsyncpa %s15, 0
    loop: start=0, step=1, limit=4
    $region2: #{tpu_custom_call.1} parent=1 // loop_pre_header
      _
    $region3: #{tpu_custom_call.1} parent=1 // loop_header
      %s18 = sphi 0, %s22
      %p19 = scmp.ge.s32.totalorder %s18, 4
      %s25 = sphi 0, %s37
      %s26 = sphi 0, %s33
      %s27 = sphi 0, %s25
      %s28 = sphi 0, %s26
      %s29 = sphi 0, %s27
      %s30 = sphi 0, %s28
      %s42 = sphi 0, %s44
      %s45 = sphi 0, %s42
      %s46 = sphi 0, %s45
      %s62 = sphi 0, %s46
      %s66 = sphi 0, %s66
      %s68 = sphi 0, %s66
      %s69 = sphi 0, %s68
      %s83 = sphi 0, %s69
      %s87 = sphi 0, %s87
      %s89 = sphi 0, %s87
      %s90 = sphi 0, %s89
      %s104 = sphi 0, %s90
      %s110 = sphi 0, %s112
      %s113 = sphi 0, %s110
      %s114 = sphi 0, %s113
      %s130 = sphi 0, %s114
      %s134 = sphi 0, %s134
      %s136 = sphi 0, %s134
      %s137 = sphi 0, %s136
      %s151 = sphi 0, %s137
      %s159 = sphi 0, %s161
      %s162 = sphi 0, %s159
      %s163 = sphi 0, %s162
      %s179 = sphi 0, %s163
    $region4: #{tpu_custom_call.1} parent=1 // loop_header_branch
      %21 = sbr.rel (%p19) target = $region8
    $region5: #{tpu_custom_call.1} parent=1 // loop_body
      %s23 = ssub.s32 %s18, 1
      %s24 = ssub.s32 %s18, 2
      %s31 = sadd.s32 1, %s26
      %p32 = scmp.ge.s32.totalorder %s31, 1
      %s33 = scalar_select %p32, 0, %s31
      %s34 = sadd.s32 1, %s25
      %s35 = scalar_select %p32, %s34, %s25
      %p36 = scmp.ge.s32.totalorder %s35, 2
      %s37 = scalar_select %p36, 0, %s35
      %s38 = ssub.s32 %s26, %s33
      %s39 = ssub.s32 %s25, %s37
      %s40 = sor.u32 %s38, %s39
      %p41 = scmp.eq.s32.totalorder %s40, 0
      %s43 = sadd.s32 %s42, 1
      %s44 = scalar_select %p41, %s42, %s43
      %p47 = pneg %p41
      %p48 = scmp.eq.s32.totalorder %s18, 1
      %p49 = por %p47, %p48
      %p50 = scmp.ne.s32.totalorder %s42, %s45
      %p51 = scmp.eq.s32.totalorder %s18, 0
      %p52 = por %p50, %p51
      %p53 = scmp.ne.s32.totalorder %s42, %s45
      %p54 = scmp.eq.s32.totalorder %s23, 1
      %p55 = por %p53, %p54
      %p56 = scmp.ne.s32.totalorder %s45, %s46
      %p57 = scmp.eq.s32.totalorder %s23, 0
      %p58 = por %p56, %p57
      %p59 = scmp.ne.s32.totalorder %s45, %s46
      %p60 = scmp.eq.s32.totalorder %s24, 1
      %p61 = por %p59, %p60
      %p63 = scmp.ne.s32.totalorder %s46, %s62
      %p64 = scmp.eq.s32.totalorder %s24, 0
      %p65 = por %p63, %p64
      %s67 = sadd.s32 %s66, 1
      %p70 = scmp.eq.s32.totalorder %s18, 1
      %p71 = scmp.ne.s32.totalorder %s66, %s68
      %p72 = scmp.eq.s32.totalorder %s18, 0
      %p73 = por %p71, %p72
      %p74 = scmp.ne.s32.totalorder %s66, %s68
      %p75 = scmp.eq.s32.totalorder %s23, 1
      %p76 = por %p74, %p75
      %p77 = scmp.ne.s32.totalorder %s68, %s69
      %p78 = scmp.eq.s32.totalorder %s23, 0
      %p79 = por %p77, %p78
      %p80 = scmp.ne.s32.totalorder %s68, %s69
      %p81 = scmp.eq.s32.totalorder %s24, 1
      %p82 = por %p80, %p81
      %p84 = scmp.ne.s32.totalorder %s69, %s83
      %p85 = scmp.eq.s32.totalorder %s24, 0
      %p86 = por %p84, %p85
      %s88 = sadd.s32 %s87, 1
      %p91 = scmp.eq.s32.totalorder %s18, 1
      %p92 = scmp.ne.s32.totalorder %s87, %s89
      %p93 = scmp.eq.s32.totalorder %s18, 0
      %p94 = por %p92, %p93
      %p95 = scmp.ne.s32.totalorder %s87, %s89
      %p96 = scmp.eq.s32.totalorder %s23, 1
      %p97 = por %p95, %p96
      %p98 = scmp.ne.s32.totalorder %s89, %s90
      %p99 = scmp.eq.s32.totalorder %s23, 0
      %p100 = por %p98, %p99
      %p101 = scmp.ne.s32.totalorder %s89, %s90
      %p102 = scmp.eq.s32.totalorder %s24, 1
      %p103 = por %p101, %p102
      %p105 = scmp.ne.s32.totalorder %s90, %s104
      %p106 = scmp.eq.s32.totalorder %s24, 0
      %p107 = por %p105, %p106
      %s108 = ssub.s32 %s25, %s37
      %p109 = scmp.eq.s32.totalorder %s108, 0
      %s111 = sadd.s32 %s110, 1
      %s112 = scalar_select %p109, %s110, %s111
      %p115 = pneg %p109
      %p116 = scmp.eq.s32.totalorder %s18, 1
      %p117 = por %p115, %p116
      %p118 = scmp.ne.s32.totalorder %s110, %s113
      %p119 = scmp.eq.s32.totalorder %s18, 0
      %p120 = por %p118, %p119
      %p121 = scmp.ne.s32.totalorder %s110, %s113
      %p122 = scmp.eq.s32.totalorder %s23, 1
      %p123 = por %p121, %p122
      %p124 = scmp.ne.s32.totalorder %s113, %s114
      %p125 = scmp.eq.s32.totalorder %s23, 0
      %p126 = por %p124, %p125
      %p127 = scmp.ne.s32.totalorder %s113, %s114
      %p128 = scmp.eq.s32.totalorder %s24, 1
      %p129 = por %p127, %p128
      %p131 = scmp.ne.s32.totalorder %s114, %s130
      %p132 = scmp.eq.s32.totalorder %s24, 0
      %p133 = por %p131, %p132
      %s135 = sadd.s32 %s134, 1
      %p138 = scmp.eq.s32.totalorder %s18, 1
      %p139 = scmp.ne.s32.totalorder %s134, %s136
      %p140 = scmp.eq.s32.totalorder %s18, 0
      %p141 = por %p139, %p140
      %p142 = scmp.ne.s32.totalorder %s134, %s136
      %p143 = scmp.eq.s32.totalorder %s23, 1
      %p144 = por %p142, %p143
      %p145 = scmp.ne.s32.totalorder %s136, %s137
      %p146 = scmp.eq.s32.totalorder %s23, 0
      %p147 = por %p145, %p146
      %p148 = scmp.ne.s32.totalorder %s136, %s137
      %p149 = scmp.eq.s32.totalorder %s24, 1
      %p150 = por %p148, %p149
      %p152 = scmp.ne.s32.totalorder %s137, %s151
      %p153 = scmp.eq.s32.totalorder %s24, 0
      %p154 = por %p152, %p153
      %s155 = ssub.s32 %s26, %s33
      %s156 = ssub.s32 %s25, %s37
      %s157 = sor.u32 %s155, %s156
      %p158 = scmp.eq.s32.totalorder %s157, 0
      %s160 = sadd.s32 %s159, 1
      %s161 = scalar_select %p158, %s159, %s160
      %p164 = pneg %p158
      %p165 = scmp.eq.s32.totalorder %s18, 1
      %p166 = por %p164, %p165
      %p167 = scmp.ne.s32.totalorder %s159, %s162
      %p168 = scmp.eq.s32.totalorder %s18, 0
      %p169 = por %p167, %p168
      %p170 = scmp.ne.s32.totalorder %s159, %s162
      %p171 = scmp.eq.s32.totalorder %s23, 1
      %p172 = por %p170, %p171
      %p173 = scmp.ne.s32.totalorder %s162, %s163
      %p174 = scmp.eq.s32.totalorder %s23, 0
      %p175 = por %p173, %p174
      %p176 = scmp.ne.s32.totalorder %s162, %s163
      %p177 = scmp.eq.s32.totalorder %s24, 1
      %p178 = por %p176, %p177
      %p180 = scmp.ne.s32.totalorder %s163, %s179
      %p181 = scmp.eq.s32.totalorder %s24, 0
      %p182 = por %p180, %p181
      %p183 = scmp.le.s32.totalorder 1, %s18
      %p184 = scmp.lt.s32.totalorder %s18, 3
      %p185 = pnand %p183, %p184
      %p186 = pneg %p185
      // Predicated region
      $region9: #{tpu_custom_call.1} parent=5 // pred_check
        _
      $region10: #{tpu_custom_call.1} parent=5 // pred_check_branch
        %188 = sbr.rel (%p185) target = $region12
      $region11: #{tpu_custom_call.1} parent=5 // pred_region
        %s189 = ssub.s32 %s18, 1
        // Predicated region
        $region13: #{tpu_custom_call.1} parent=11 // pred_check
          %p190 = pneg %p79
        $region14: #{tpu_custom_call.1} parent=11 // pred_check_branch
          %192 = sbr.rel (%p190) target = $region16
        $region15: #{tpu_custom_call.1} parent=11 // pred_region
          %s194 = ssub.s32 64, 64
          %195 = vsyncadd [#allocation7], %s194
          %s197 = sshll.u32 [#allocation6], 4
          %s198 = int_to_ptr.vmem [resolvable:$true] %s197
          %200 = dma.hbm_to_vmem [thread:$0]  %s1, 64, %s198, [#allocation7]
        $region16: #{tpu_custom_call.1} parent=11 // pred_fallthru
          _
        // Predicated region
        $region17: #{tpu_custom_call.1} parent=11 // pred_check
          %p201 = pneg %p100
        $region18: #{tpu_custom_call.1} parent=11 // pred_check_branch
          %203 = sbr.rel (%p201) target = $region20
        $region19: #{tpu_custom_call.1} parent=11 // pred_region
          %s205 = ssub.s32 2048, 2048
          %206 = vsyncadd [#allocation7], %s205
          %s207 = sshll.u32 [#allocation8], 4
          %s208 = int_to_ptr.vmem [resolvable:$true] %s207
          %213 = dma.hbm_to_vmem [thread:$0]  %s2, 2048, %s208, [#allocation7], 64, 64, 4
        $region20: #{tpu_custom_call.1} parent=11 // pred_fallthru
          _
        // Predicated region
        $region21: #{tpu_custom_call.1} parent=11 // pred_check
          %p214 = pneg %p147
        $region22: #{tpu_custom_call.1} parent=11 // pred_check_branch
          %216 = sbr.rel (%p214) target = $region24
        $region23: #{tpu_custom_call.1} parent=11 // pred_region
          _
        $region24: #{tpu_custom_call.1} parent=11 // pred_fallthru
          _
      $region12: #{tpu_custom_call.1} parent=5 // pred_fallthru
        _
      %p217 = scmp.lt.s32.totalorder %s18, 2
      // Predicated region
      $region25: #{tpu_custom_call.1} parent=5 // pred_check
        %p218 = pneg %p217
      $region26: #{tpu_custom_call.1} parent=5 // pred_check_branch
        %220 = sbr.rel (%p218) target = $region28
      $region27: #{tpu_custom_call.1} parent=5 // pred_region
        // Predicated region
        $region29: #{tpu_custom_call.1} parent=27 // pred_check
          %p221 = pneg %p52
        $region30: #{tpu_custom_call.1} parent=27 // pred_check_branch
          %223 = sbr.rel (%p221) target = $region32
        $region31: #{tpu_custom_call.1} parent=27 // pred_region
          %s224 = sand.u32 %s42, 1
          %s225 = scalar_lea.sflag [#allocation4], %s224
          %s226 = sand.u32 %s42, 1
          %s227 = smul.addr %s226, 8
          %s228 = scalar_lea.vmem [#allocation3], %s227
          %s230 = ssub.s32 128, 128
          %231 = vsyncadd %s225, %s230
          %s232 = smul.addr %s26, 2
          %s233 = sadd.s32 %s25, %s232
          %s234 = smul.addr %s233, 128
          %s235 = scalar_lea.hbm %s0, %s234
          %s237 = sshll.u32 %s228, 4
          %s238 = int_to_ptr.vmem [resolvable:$true] %s237
          %240 = dma.hbm_to_vmem [thread:$0]  %s235, 128, %s238, %s225
        $region32: #{tpu_custom_call.1} parent=27 // pred_fallthru
          _
        // Predicated region
        $region33: #{tpu_custom_call.1} parent=27 // pred_check
          %p241 = pneg %p120
        $region34: #{tpu_custom_call.1} parent=27 // pred_check_branch
          %243 = sbr.rel (%p241) target = $region36
        $region35: #{tpu_custom_call.1} parent=27 // pred_region
          %p244 = scmp.lt.s32.totalorder %s25, 1
          %s245 = scalar_select %p244, %s25, 1
          %s246 = scalar_lea.vmem %s3, %s245
        $region36: #{tpu_custom_call.1} parent=27 // pred_fallthru
          _
      $region28: #{tpu_custom_call.1} parent=5 // pred_fallthru
        _
      %p247 = scmp.le.s32.totalorder 1, %s18
      %p248 = scmp.lt.s32.totalorder %s18, 3
      %p249 = pnand %p247, %p248
      %p250 = pneg %p249
      // Predicated region
      $region37: #{tpu_custom_call.1} parent=5 // pred_check
        _
      $region38: #{tpu_custom_call.1} parent=5 // pred_check_branch
        %252 = sbr.rel (%p249) target = $region40
      $region39: #{tpu_custom_call.1} parent=5 // pred_region
        %s253 = ssub.s32 %s18, 1
        %s254 = sand.u32 %s45, 1
        %s255 = scalar_lea.sflag [#allocation4], %s254
        %s256 = sand.u32 %s45, 1
        %s257 = smul.addr %s256, 8
        %s258 = scalar_lea.vmem [#allocation3], %s257
        // Predicated region
        $region41: #{tpu_custom_call.1} parent=39 // pred_check
          %p259 = pneg %p58
        $region42: #{tpu_custom_call.1} parent=39 // pred_check_branch
          %261 = sbr.rel (%p259) target = $region44
        $region43: #{tpu_custom_call.1} parent=39 // pred_region
          %262 = dma.done %s255, 128
        $region44: #{tpu_custom_call.1} parent=39 // pred_fallthru
          _
        // Predicated region
        $region45: #{tpu_custom_call.1} parent=39 // pred_check
          %p263 = pneg %p79
        $region46: #{tpu_custom_call.1} parent=39 // pred_check_branch
          %265 = sbr.rel (%p263) target = $region48
        $region47: #{tpu_custom_call.1} parent=39 // pred_region
          %266 = dma.done [#allocation7], 64
        $region48: #{tpu_custom_call.1} parent=39 // pred_fallthru
          _
        // Predicated region
        $region49: #{tpu_custom_call.1} parent=39 // pred_check
          %p267 = pneg %p100
        $region50: #{tpu_custom_call.1} parent=39 // pred_check_branch
          %269 = sbr.rel (%p267) target = $region52
        $region51: #{tpu_custom_call.1} parent=39 // pred_region
          %270 = dma.done [#allocation7], 2048
        $region52: #{tpu_custom_call.1} parent=39 // pred_fallthru
          _
        %s271 = sand.u32 %s45, 1
        %s272 = scalar_lea.sflag [#allocation4], %s271
        %s273 = sand.u32 %s45, 1
        %s274 = smul.addr %s273, 8
        %s275 = scalar_lea.vmem [#allocation3], %s274
        %p276 = pneg %p58
        %p277 = pneg %p55
        %p278 = pneg %p79
        %p279 = pneg %p76
        %p280 = pneg %p100
        %p281 = pneg %p97
        %p282 = scmp.lt.s32.totalorder %s27, 1
        %s283 = scalar_select %p282, %s27, 1
        %s284 = scalar_lea.vmem %s3, %s283
        %p285 = pneg %p126
        %p286 = pneg %p123
        %p287 = pneg %p147
        %p288 = pneg %p144
        %p289 = pneg %p175
        %p290 = pneg %p172
        %s291 = sand.u32 %s162, 1
        %s292 = scalar_lea.sflag [#allocation5], %s291
        %s293 = sand.u32 %s162, 1
        %s294 = smul.addr %s293, 8
        %s295 = scalar_lea.vmem [#allocation9], %s294
        %p296 = scmp.lt.s32.totalorder %s27, 1
        %s297 = scalar_select %p296, %s27, 1
        %s298 = scalar_lea.vmem %s3, %s297
        %p300 = scmp.lt.s32.totalorder %s27, 0
        %s301 = ssub.s32 0, %s27
        %s302 = scalar_select %p300, %s301, %s27
        %s303 = sand.u32 %s302, 1
        %s304 = ssub.s32 0, %s303
        %s305 = scalar_select %p300, %s304, %s303
        %p306 = scmp.ne.s32.totalorder %s305, 0
        %p307 = scmp.lt.s32.totalorder %s305, 0
        %p308 = pnand %p307, %p306
        %p309 = pneg %p308
        %s310 = sadd.s32 %s305, 2
        %s311 = scalar_select %p309, %s310, %s305
        %s312 = smul.u32 %s28, 8
        %p313 = scmp.eq.s32.totalorder %s27, 0
        %p314 = scmp.eq.s32.totalorder %s28, 0
        %p315 = pnand %p313, %p314
        %p316 = pneg %p315
        // Predicated region
        $region53: #{tpu_custom_call.1} parent=39 // pred_check
          _
        $region54: #{tpu_custom_call.1} parent=39 // pred_check_branch
          %318 = sbr.rel (%p315) target = $region56
        $region55: #{tpu_custom_call.1} parent=39 // pred_region
          %v319 = vld [vmem:[%s4] sm:$0xf]
          %320 = vst [vmem:[#allocation2] sm:$0xf] %v319
        $region56: #{tpu_custom_call.1} parent=39 // pred_fallthru
          _
        %s321 = sshra.s32 %s312, 3
        %s322 = sand.u32 %s312, 7
        %s323 = smul.addr %s321, 4
        %s324 = scalar_lea.vmem [#allocation6], %s323
        %v325 = vld [vmem:[%s324] sm:$0xf]
        %s326 = smul.addr %s311, 4
        %s327 = scalar_lea.vmem [#allocation2], %s326
        %v328 = vld [vmem:[%s327] sm:$0xf]
        %vm329 = vcmask 64512
        %v331 = vsel %vm329, %v325, 0
        %vm333 = vcmask 1043456
        %v335 = vsel %vm333, %v328, 0
        %337 = vmatprep.subr.bf16.mxu0 0
        %338 = vmatpush1.bf16.msra.mxu0 %v335
        %339 = vmatprep.subr.bf16.mxu0 0
        %340 = vmatpush1.bf16.msra.mxu0 0
        %341 = vmatprep.subr.bf16.mxu0 0
        %342 = vmatpush1.bf16.msra.mxu0 0
        %343 = vmatprep.subr.bf16.mxu0 0
        %344 = vmatpush1.bf16.msra.mxu0 0
        %345 = vmatprep.subr.bf16.mxu0 0
        %346 = vmatpush1.bf16.msra.mxu0 0
        %347 = vmatprep.subr.bf16.mxu0 0
        %348 = vmatpush1.bf16.msra.mxu0 0
        %349 = vmatprep.subr.bf16.mxu0 0
        %350 = vmatpush1.bf16.msra.mxu0 0
        %351 = vmatprep.subr.bf16.mxu0 0
        %352 = vmatpush1.bf16.msra.mxu0 0
        %353 = vmatprep.subr.bf16.mxu0 0
        %354 = vmatpush1.bf16.msra.mxu0 0
        %355 = vmatprep.subr.bf16.mxu0 0
        %356 = vmatpush1.bf16.msra.mxu0 0
        %357 = vmatprep.subr.bf16.mxu0 0
        %358 = vmatpush1.bf16.msra.mxu0 0
        %359 = vmatprep.subr.bf16.mxu0 0
        %360 = vmatpush1.bf16.msra.mxu0 0
        %361 = vmatprep.subr.bf16.mxu0 0
        %362 = vmatpush1.bf16.msra.mxu0 0
        %363 = vmatprep.subr.bf16.mxu0 0
        %364 = vmatpush1.bf16.msra.mxu0 0
        %365 = vmatprep.subr.bf16.mxu0 0
        %366 = vmatpush1.bf16.msra.mxu0 0
        %367 = vmatprep.subr.bf16.mxu0 0
        %368 = vmatpush1.bf16.msra.mxu0 0
        %369 = vmatprep.mubr.bf16.mxu0 0
        %370 = vmatmul.mubr.bf16.gmra.mrb[0].mxu0 %v331
        %v371 = vpop.f32.mrb[0].mxu0
        %v372 = vadd.f32 0.0, %v371
        %v373 = vpop.f32.mrb[0].mxu0
        %v374 = vpop.f32.mrb[0].mxu0
        %v375 = vpop.f32.mrb[0].mxu0
        %376 = vdwg.mxu0
        %v377 = vld [vmem:[%s258] sm:$0xff]
        %v378 = vadd.f32 %v377, %v372
        %v379 = vld [vmem:[%s298] sm:$0x1]
        %v381 = vlaneseq
        %v382 = vshrl.u32 %v381, 7
        %v383 = vsub.s32 0, %v382
        %v384 = vrot.slane %v379, %v383
        %v386 = vadd.f32 %v378, %v384
        %387 = vst [vmem:[%s295] sm:$0xff] %v386
        %s388 = sadd.s32 %s27, 1
        %p389 = scmp.lt.s32.totalorder %s388, 2
        // Predicated region
        $region57: #{tpu_custom_call.1} parent=39 // pred_check
          %p390 = pneg %p389
        $region58: #{tpu_custom_call.1} parent=39 // pred_check_branch
          %392 = sbr.rel (%p390) target = $region60
        $region59: #{tpu_custom_call.1} parent=39 // pred_region
          %p393 = scmp.lt.s32.totalorder %s388, 1
          %s394 = scalar_select %p393, %s388, 1
          %s395 = smul.u32 %s394, 16
          %s396 = smul.addr %s395, 4
          %s397 = scalar_lea.vmem [#allocation8], %s396
          %v398 = vld [vmem:[%s397] sm:$0xf]
          %v399 = vld [vmem:[%s397 + $0x4] sm:$0xf]
          %v400 = vld [vmem:[%s397 + $0x8] sm:$0xf]
          %v401 = vld [vmem:[%s397 + $0xc] sm:$0xf]
          %v402 = vld [vmem:[%s397 + $0x10] sm:$0xf]
          %v403 = vld [vmem:[%s397 + $0x14] sm:$0xf]
          %v404 = vld [vmem:[%s397 + $0x18] sm:$0xf]
          %v405 = vld [vmem:[%s397 + $0x1c] sm:$0xf]
          %v406 = vld [vmem:[%s397 + $0x20] sm:$0xf]
          %v407 = vld [vmem:[%s397 + $0x24] sm:$0xf]
          %v408 = vld [vmem:[%s397 + $0x28] sm:$0xf]
          %v409 = vld [vmem:[%s397 + $0x2c] sm:$0xf]
          %v410 = vld [vmem:[%s397 + $0x30] sm:$0xf]
          %v411 = vld [vmem:[%s397 + $0x34] sm:$0xf]
          %v412 = vld [vmem:[%s397 + $0x38] sm:$0xf]
          %v413 = vld [vmem:[%s397 + $0x3c] sm:$0xf]
          %v414 = vpack.c.bf16 %v386, %v386
          %v431 = vunpack.c.l.b16 %v398
          %v432 = vunpack.c.l.b16 %v399
          %v433 = vunpack.c.l.b16 %v400
          %v434 = vunpack.c.l.b16 %v401
          %v435 = vunpack.c.l.b16 %v402
          %v436 = vunpack.c.l.b16 %v403
          %v437 = vunpack.c.l.b16 %v404
          %v438 = vunpack.c.l.b16 %v405
          %v439 = vunpack.c.l.b16 %v406
          %v440 = vunpack.c.l.b16 %v407
          %v441 = vunpack.c.l.b16 %v408
          %v442 = vunpack.c.l.b16 %v409
          %v443 = vunpack.c.l.b16 %v410
          %v444 = vunpack.c.l.b16 %v411
          %v445 = vunpack.c.l.b16 %v412
          %v446 = vunpack.c.l.b16 %v413
          %v447 = vpack.c.b16 %v432, %v431
          %v448 = vpack.c.b16 %v434, %v433
          %v449 = vpack.c.b16 %v436, %v435
          %v450 = vpack.c.b16 %v438, %v437
          %v451 = vpack.c.b16 %v440, %v439
          %v452 = vpack.c.b16 %v442, %v441
          %v453 = vpack.c.b16 %v444, %v443
          %v454 = vpack.c.b16 %v446, %v445
          %463 = vmatprep.subr.bf16.mxu0 0
          %464 = vmatpush1.bf16.msra.mxu0 %v447
          %465 = vmatprep.subr.bf16.mxu0 0
          %466 = vmatpush1.bf16.msra.mxu0 %v448
          %467 = vmatprep.subr.bf16.mxu0 0
          %468 = vmatpush1.bf16.msra.mxu0 %v449
          %469 = vmatprep.subr.bf16.mxu0 0
          %470 = vmatpush1.bf16.msra.mxu0 %v450
          %471 = vmatprep.subr.bf16.mxu0 0
          %472 = vmatpush1.bf16.msra.mxu0 %v451
          %473 = vmatprep.subr.bf16.mxu0 0
          %474 = vmatpush1.bf16.msra.mxu0 %v452
          %475 = vmatprep.subr.bf16.mxu0 0
          %476 = vmatpush1.bf16.msra.mxu0 %v453
          %477 = vmatprep.subr.bf16.mxu0 0
          %478 = vmatpush1.bf16.msra.mxu0 %v454
          %479 = vmatprep.subr.bf16.mxu0 0
          %480 = vmatpush1.bf16.msra.mxu0 0
          %481 = vmatprep.subr.bf16.mxu0 0
          %482 = vmatpush1.bf16.msra.mxu0 0
          %483 = vmatprep.subr.bf16.mxu0 0
          %484 = vmatpush1.bf16.msra.mxu0 0
          %485 = vmatprep.subr.bf16.mxu0 0
          %486 = vmatpush1.bf16.msra.mxu0 0
          %487 = vmatprep.subr.bf16.mxu0 0
          %488 = vmatpush1.bf16.msra.mxu0 0
          %489 = vmatprep.subr.bf16.mxu0 0
          %490 = vmatpush1.bf16.msra.mxu0 0
          %491 = vmatprep.subr.bf16.mxu0 0
          %492 = vmatpush1.bf16.msra.mxu0 0
          %493 = vmatprep.subr.bf16.mxu0 0
          %494 = vmatpush1.bf16.msra.mxu0 0
          %495 = vmatprep.mubr.bf16.mxu0 0
          %496 = vmatmul.mubr.bf16.gmra.mrb[0].mxu0 %v414
          %v497 = vpop.f32.mrb[0].mxu0
          %v498 = vadd.f32 0.0, %v497
          %v499 = vpop.f32.mrb[0].mxu0
          %v500 = vpop.f32.mrb[0].mxu0
          %v501 = vpop.f32.mrb[0].mxu0
          %502 = vdwg.mxu0
          %v503 = vpack.c.bf16 %v498, %v498
          %s504 = ssub.s32 1, %s311
          %s505 = sadd.s32 %s321, %s504
          %s506 = smul.addr %s505, 4
          %s507 = scalar_lea.vmem [#allocation2], %s506
          %508 = vst [vmem:[%s507] sm:$0xf] %v503
        $region60: #{tpu_custom_call.1} parent=39 // pred_fallthru
          _
        %s509 = sand.u32 %s162, 1
        %s510 = scalar_lea.sflag [#allocation5], %s509
        %s511 = sand.u32 %s162, 1
        %s512 = smul.addr %s511, 8
        %s513 = scalar_lea.vmem [#allocation9], %s512
        // Predicated region
        $region61: #{tpu_custom_call.1} parent=39 // pred_check
          %p514 = pneg %p172
        $region62: #{tpu_custom_call.1} parent=39 // pred_check_branch
          %516 = sbr.rel (%p514) target = $region64
        $region63: #{tpu_custom_call.1} parent=39 // pred_region
          %s518 = ssub.s32 128, 128
          %519 = vsyncadd %s510, %s518
          %s520 = smul.addr %s28, 2
          %s521 = sadd.s32 %s27, %s520
          %s522 = smul.addr %s521, 128
          %s523 = scalar_lea.hbm %s5, %s522
          %s525 = sshll.u32 %s513, 4
          %s526 = int_to_ptr.vmem [resolvable:$true] %s525
          %528 = dma.vmem_to_hbm [thread:$0]  %s526, 128, %s523, %s510
        $region64: #{tpu_custom_call.1} parent=39 // pred_fallthru
          _
      $region40: #{tpu_custom_call.1} parent=5 // pred_fallthru
        _
      %p529 = scmp.le.s32.totalorder 2, %s18
      // Predicated region
      $region65: #{tpu_custom_call.1} parent=5 // pred_check
        %p530 = pneg %p529
      $region66: #{tpu_custom_call.1} parent=5 // pred_check_branch
        %532 = sbr.rel (%p530) target = $region68
      $region67: #{tpu_custom_call.1} parent=5 // pred_region
        %s533 = ssub.s32 %s18, 2
        // Predicated region
        $region69: #{tpu_custom_call.1} parent=67 // pred_check
          %p534 = pneg %p178
        $region70: #{tpu_custom_call.1} parent=67 // pred_check_branch
          %536 = sbr.rel (%p534) target = $region72
        $region71: #{tpu_custom_call.1} parent=67 // pred_region
          %s537 = sand.u32 %s163, 1
          %s538 = scalar_lea.sflag [#allocation5], %s537
          %s539 = sand.u32 %s163, 1
          %s540 = smul.addr %s539, 8
          %s541 = scalar_lea.vmem [#allocation9], %s540
          %542 = dma.done %s538, 128
        $region72: #{tpu_custom_call.1} parent=67 // pred_fallthru
          _
      $region68: #{tpu_custom_call.1} parent=5 // pred_fallthru
        _
    $region6: #{tpu_custom_call.1} parent=1 // loop_footer
      %s22 = sadd.s32 1, %s18
    $region7: #{tpu_custom_call.1} parent=1 // loop_footer_branch
      %17 = sbr.rel target = $region3
    $region8: #{tpu_custom_call.1} parent=1 // loop_exit
      _
    %543 = vsyncpa [#allocation4], 1
    %s544 = scalar_lea.sflag [#allocation4], 1
    %545 = vsyncpa %s544, 1
    %546 = vsyncpa [#allocation7], 1
    %547 = vsyncpa [#allocation5], 1
    %s548 = scalar_lea.sflag [#allocation5], 1
    %549 = vsyncpa %s548, 1

</llo_original>
